<compile_context>
chip_gen: v7x
topology: tpu7x:2x2x1
jax: 0.10.0
libtpu: 0.0.40
codegen_flags: <defaults>
</compile_context>

<pallas_src>
import functools
import math

import jax
import jax.numpy as jnp
from jax.experimental import pallas as pl
from jax.experimental.pallas import tpu as pltpu


# ----------------------------------------------------------------------------
# small helpers
# ----------------------------------------------------------------------------
def _ceil(x, m):
    return ((x + m - 1) // m) * m


def _pad2(a, rows, cols):
    pr, pc = rows - a.shape[0], cols - a.shape[1]
    if pr == 0 and pc == 0:
        return a
    return jnp.pad(a, ((0, pr), (0, pc)))


def _pad_seq3(a, sp):
    p = sp - a.shape[1]
    if p == 0:
        return a
    return jnp.pad(a, ((0, 0), (0, p), (0, 0)))


def _seq_tile(s, max_tile=128):
    sp = _ceil(s, 8)
    if sp <= max_tile:
        return sp, sp
    sp = _ceil(s, max_tile)
    return sp, max_tile


# ----------------------------------------------------------------------------
# Tiled matmul kernels (bf16 in, f32 accumulate), optional gelu / residual
# ----------------------------------------------------------------------------
def _matmul_kernel(x_ref, w_ref, o_ref, acc_ref, *, activation, nk):
    @pl.when(pl.program_id(2) == 0)
    def _():
        acc_ref[...] = jnp.zeros_like(acc_ref)

    acc_ref[...] += jnp.dot(x_ref[...], w_ref[...],
                            preferred_element_type=jnp.float32)

    @pl.when(pl.program_id(2) == nk - 1)
    def _():
        y = acc_ref[...]
        if activation == "gelu":
            y = jax.nn.gelu(y, approximate=True)
        o_ref[...] = y.astype(o_ref.dtype)


def _matmul_resid_kernel(x_ref, w_ref, r_ref, o_ref, acc_ref, *, nk):
    @pl.when(pl.program_id(2) == 0)
    def _():
        acc_ref[...] = jnp.zeros_like(acc_ref)

    acc_ref[...] += jnp.dot(x_ref[...], w_ref[...],
                            preferred_element_type=jnp.float32)

    @pl.when(pl.program_id(2) == nk - 1)
    def _():
        o_ref[...] = (acc_ref[...] + r_ref[...]).astype(o_ref.dtype)


def pallas_matmul(x, w, *, residual=None, activation=None,
                  out_dtype=jnp.float32, tm=256, tn=256, tk=512):
    """(M, K) @ (K, N) -> (M, N). bf16 operands, f32 accumulate.
    Optionally fuse tanh-GELU or a residual add into the epilogue."""
    M, K = x.shape
    _, N = w.shape
    tm = min(tm, _ceil(M, 8))
    tn = min(tn, _ceil(N, 128))
    tk = min(tk, _ceil(K, 128))
    Mp, Np, Kp = _ceil(M, tm), _ceil(N, tn), _ceil(K, tk)
    xp = _pad2(x, Mp, Kp).astype(jnp.bfloat16)
    wp = _pad2(w, Kp, Np).astype(jnp.bfloat16)
    grid = (Mp // tm, Np // tn, Kp // tk)

    in_specs = [pl.BlockSpec((tm, tk), lambda i, j, k: (i, k)),
                pl.BlockSpec((tk, tn), lambda i, j, k: (k, j))]
    args = [xp, wp]
    if residual is not None:
        rp = _pad2(residual.astype(jnp.float32), Mp, Np)
        in_specs.append(pl.BlockSpec((tm, tn), lambda i, j, k: (i, j)))
        args.append(rp)
        kern = functools.partial(_matmul_resid_kernel, nk=grid[2])
    else:
        kern = functools.partial(_matmul_kernel, activation=activation,
                                 nk=grid[2])

    out = pl.pallas_call(
        kern,
        out_shape=jax.ShapeDtypeStruct((Mp, Np), out_dtype),
        grid=grid,
        in_specs=in_specs,
        out_specs=pl.BlockSpec((tm, tn), lambda i, j, k: (i, j)),
        scratch_shapes=[pltpu.VMEM((tm, tn), jnp.float32)],
        compiler_params=pltpu.CompilerParams(
            dimension_semantics=("parallel", "parallel", "arbitrary")),
    )(*args)
    return out[:M, :N]


# ----------------------------------------------------------------------------
# Fused RMSNorm + matmul  /  RMSNorm + GeGLU (K kept whole per block)
# ----------------------------------------------------------------------------
def _rmsnorm_matmul_kernel(x_ref, g_ref, w_ref, o_ref, *, d_actual):
    x = x_ref[...]                                            # (tm, Kp) f32
    var = jnp.sum(x * x, axis=-1, keepdims=True) * (1.0 / d_actual)
    h = x * jax.lax.rsqrt(var + 1e-6) * (1.0 + g_ref[...])    # Gemma (1+gamma)
    o_ref[...] = jnp.dot(h.astype(jnp.bfloat16), w_ref[...],
                         preferred_element_type=jnp.float32)


def pallas_rmsnorm_matmul(x2d, gamma, w, *, tm=256, tn=256):
    M, K = x2d.shape
    _, N = w.shape
    tm = min(tm, _ceil(M, 8))
    tn = min(tn, _ceil(N, 128))
    Mp, Np, Kp = _ceil(M, tm), _ceil(N, tn), _ceil(K, 128)
    xp = _pad2(x2d.astype(jnp.float32), Mp, Kp)
    gp = _pad2(gamma.reshape(1, K).astype(jnp.float32), 1, Kp)
    wp = _pad2(w, Kp, Np).astype(jnp.bfloat16)
    kern = functools.partial(_rmsnorm_matmul_kernel, d_actual=float(K))
    out = pl.pallas_call(
        kern,
        out_shape=jax.ShapeDtypeStruct((Mp, Np), jnp.float32),
        grid=(Mp // tm, Np // tn),
        in_specs=[pl.BlockSpec((tm, Kp), lambda i, j: (i, 0)),
                  pl.BlockSpec((1, Kp), lambda i, j: (0, 0)),
                  pl.BlockSpec((Kp, tn), lambda i, j: (0, j))],
        out_specs=pl.BlockSpec((tm, tn), lambda i, j: (i, j)),
        compiler_params=pltpu.CompilerParams(
            dimension_semantics=("parallel", "parallel")),
    )(xp, gp, wp)
    return out[:M, :N]


def _rmsnorm_geglu_kernel(x_ref, g_ref, wg_ref, wu_ref, o_ref, *, d_actual):
    x = x_ref[...]
    var = jnp.sum(x * x, axis=-1, keepdims=True) * (1.0 / d_actual)
    h = (x * jax.lax.rsqrt(var + 1e-6) * (1.0 + g_ref[...])).astype(jnp.bfloat16)
    gate = jnp.dot(h, wg_ref[...], preferred_element_type=jnp.float32)
    up = jnp.dot(h, wu_ref[...], preferred_element_type=jnp.float32)
    o_ref[...] = (jax.nn.gelu(gate, approximate=True) * up).astype(o_ref.dtype)


def pallas_rmsnorm_geglu(x2d, gamma, w_gate, w_up, *, tm=256, tn=256):
    """gelu(rms(x) @ w_gate) * (rms(x) @ w_up), bf16 output (feeds w_down)."""
    M, K = x2d.shape
    _, N = w_gate.shape
    tm = min(tm, _ceil(M, 8))
    tn = min(tn, _ceil(N, 128))
    Mp, Np, Kp = _ceil(M, tm), _ceil(N, tn), _ceil(K, 128)
    xp = _pad2(x2d.astype(jnp.float32), Mp, Kp)
    gp = _pad2(gamma.reshape(1, K).astype(jnp.float32), 1, Kp)
    wgp = _pad2(w_gate, Kp, Np).astype(jnp.bfloat16)
    wup = _pad2(w_up, Kp, Np).astype(jnp.bfloat16)
    kern = functools.partial(_rmsnorm_geglu_kernel, d_actual=float(K))
    out = pl.pallas_call(
        kern,
        out_shape=jax.ShapeDtypeStruct((Mp, Np), jnp.bfloat16),
        grid=(Mp // tm, Np // tn),
        in_specs=[pl.BlockSpec((tm, Kp), lambda i, j: (i, 0)),
                  pl.BlockSpec((1, Kp), lambda i, j: (0, 0)),
                  pl.BlockSpec((Kp, tn), lambda i, j: (0, j)),
                  pl.BlockSpec((Kp, tn), lambda i, j: (0, j))],
        out_specs=pl.BlockSpec((tm, tn), lambda i, j: (i, j)),
        compiler_params=pltpu.CompilerParams(
            dimension_semantics=("parallel", "parallel")),
    )(xp, gp, wgp, wup)
    return out[:M, :N]


# ----------------------------------------------------------------------------
# Flash-style attention with in-kernel (causal + key-pad) masking
# ----------------------------------------------------------------------------
def _flash_attn_kernel(q_ref, k_ref, v_ref, mask_ref, o_ref,
                       m_sc, l_sc, acc_sc, *, scale, causal, tq, tk, nk):
    ki = pl.program_id(3)

    @pl.when(ki == 0)
    def _():
        m_sc[...] = jnp.full_like(m_sc, -1e30)
        l_sc[...] = jnp.zeros_like(l_sc)
        acc_sc[...] = jnp.zeros_like(acc_sc)

    q = q_ref[0]                              # (tq, hd) bf16
    k = k_ref[0]                              # (tk, hd) bf16
    v = v_ref[0]                              # (tk, hd) bf16
    s = jax.lax.dot_general(q, k, (((1,), (1,)), ((), ())),
                            preferred_element_type=jnp.float32) * scale

    kmask = mask_ref[0] > 0                   # (1, tk)
    allow = jnp.broadcast_to(kmask, s.shape)
    if causal:
        qi = pl.program_id(2)
        qpos = qi * tq + jax.lax.broadcasted_iota(jnp.int32, s.shape, 0)
        kpos = ki * tk + jax.lax.broadcasted_iota(jnp.int32, s.shape, 1)
        allow = jnp.logical_and(allow, kpos <= qpos)
    s = jnp.where(allow, s, -1e30)

    m_new = jnp.maximum(m_sc[...], jnp.max(s, axis=-1, keepdims=True))
    alpha = jnp.exp(m_sc[...] - m_new)
    p = jnp.exp(s - m_new)
    l_sc[...] = alpha * l_sc[...] + jnp.sum(p, axis=-1, keepdims=True)
    acc_sc[...] = alpha * acc_sc[...] + jnp.dot(
        p.astype(jnp.bfloat16), v, preferred_element_type=jnp.float32)
    m_sc[...] = m_new

    @pl.when(ki == nk - 1)
    def _():
        o_ref[0] = acc_sc[...] * pl.reciprocal(l_sc[...], approx=True)


def pallas_mha(q, k, v, key_mask, *, num_heads, causal, scale):
    """q: (B, Sq, H*hd), k/v: (B, Sk, H*hd), key_mask: (B, Sk).
    Head split is done in the BlockSpec index_map (no transposes)."""
    B, Sq, D = q.shape
    _, Sk, _ = k.shape
    hd = D // num_heads
    Sqp, tq = _seq_tile(Sq)
    Skp, tk = _seq_tile(Sk)
    qp = _pad_seq3(q, Sqp).astype(jnp.bfloat16)
    kp = _pad_seq3(k, Skp).astype(jnp.bfloat16)
    vp = _pad_seq3(v, Skp).astype(jnp.bfloat16)
    mp = jnp.zeros((B, 1, Skp), jnp.int32).at[:, 0, :Sk].set(
        key_mask.astype(jnp.int32))
    nq, nkt = Sqp // tq, Skp // tk
    kern = functools.partial(_flash_attn_kernel, scale=scale, causal=causal,
                             tq=tq, tk=tk, nk=nkt)
    out = pl.pallas_call(
        kern,
        out_shape=jax.ShapeDtypeStruct((B, Sqp, D), jnp.float32),
        grid=(B, num_heads, nq, nkt),
        in_specs=[
            pl.BlockSpec((1, tq, hd), lambda b, h, qi, ki: (b, qi, h)),
            pl.BlockSpec((1, tk, hd), lambda b, h, qi, ki: (b, ki, h)),
            pl.BlockSpec((1, tk, hd), lambda b, h, qi, ki: (b, ki, h)),
            pl.BlockSpec((1, 1, tk), lambda b, h, qi, ki: (b, 0, ki)),
        ],
        out_specs=pl.BlockSpec((1, tq, hd), lambda b, h, qi, ki: (b, qi, h)),
        scratch_shapes=[pltpu.VMEM((tq, 1), jnp.float32),
                        pltpu.VMEM((tq, 1), jnp.float32),
                        pltpu.VMEM((tq, hd), jnp.float32)],
        compiler_params=pltpu.CompilerParams(
            dimension_semantics=("parallel", "parallel", "parallel",
                                 "arbitrary")),
    )(qp, kp, vp, mp)
    return out[:, :Sq, :]


# ----------------------------------------------------------------------------
# Fused final RMSNorm + tied LM head + per-token CE (streaming over vocab)
# ----------------------------------------------------------------------------
def _lmhead_ce_kernel(x_ref, g_ref, lbl_ref, w_ref, logits_ref, loss_ref,
                      m_sc, l_sc, p_sc, *, d_actual, v_actual, tv, nv):
    j = pl.program_id(1)

    @pl.when(j == 0)
    def _():
        m_sc[...] = jnp.full_like(m_sc, -1e30)
        l_sc[...] = jnp.zeros_like(l_sc)
        p_sc[...] = jnp.zeros_like(p_sc)

    x = x_ref[...]                                            # (tm, Dp) f32
    var = jnp.sum(x * x, axis=-1, keepdims=True) * (1.0 / d_actual)
    h = x * jax.lax.rsqrt(var + 1e-6) * (1.0 + g_ref[...])
    logits = jnp.dot(h.astype(jnp.bfloat16), w_ref[...],
                     preferred_element_type=jnp.float32)      # (tm, tv)
    logits_ref[...] = logits

    col = j * tv + jax.lax.broadcasted_iota(jnp.int32, logits.shape, 1)
    in_vocab = col < v_actual
    masked = jnp.where(in_vocab, logits, -1e30)

    m_new = jnp.maximum(m_sc[...], jnp.max(masked, axis=-1, keepdims=True))
    alpha = jnp.exp(m_sc[...] - m_new)
    l_sc[...] = alpha * l_sc[...] + jnp.sum(jnp.exp(masked - m_new),
                                            axis=-1, keepdims=True)
    m_sc[...] = m_new

    lbl = lbl_ref[...]                                        # (tm, 1) int32
    onehot = (col == lbl).astype(jnp.float32)
    p_sc[...] += jnp.sum(logits * onehot, axis=-1, keepdims=True)

    @pl.when(j == nv - 1)
    def _():
        valid = lbl_ref[...] != -100
        lse = m_sc[...] + jnp.log(l_sc[...])
        loss_ref[...] = jnp.where(valid, lse - p_sc[...], 0.0)


def pallas_lmhead_ce(x2d, gamma, w_t, labels, *, tm=256, tv=256):
    """x2d: (M, D) pre-norm hidden, w_t: (D, V) tied head, labels: (M,) int32
    with -100 = ignore.  Returns (logits (M, V) f32, per-token loss (M,))."""
    M, D = x2d.shape
    _, V = w_t.shape
    tm = min(tm, _ceil(M, 8))
    tv = min(tv, _ceil(V, 128))
    Mp, Vp, Dp = _ceil(M, tm), _ceil(V, tv), _ceil(D, 128)
    xp = _pad2(x2d.astype(jnp.float32), Mp, Dp)
    gp = _pad2(gamma.reshape(1, D).astype(jnp.float32), 1, Dp)
    wp = _pad2(w_t, Dp, Vp).astype(jnp.bfloat16)
    lp = jnp.full((Mp, 1), -100, jnp.int32).at[:M, 0].set(
        labels.astype(jnp.int32))
    nv = Vp // tv
    kern = functools.partial(_lmhead_ce_kernel, d_actual=float(D),
                             v_actual=V, tv=tv, nv=nv)
    logits, loss = pl.pallas_call(
        kern,
        out_shape=(jax.ShapeDtypeStruct((Mp, Vp), jnp.float32),
                   jax.ShapeDtypeStruct((Mp, 1), jnp.float32)),
        grid=(Mp // tm, nv),
        in_specs=[pl.BlockSpec((tm, Dp), lambda i, j: (i, 0)),
                  pl.BlockSpec((1, Dp), lambda i, j: (0, 0)),
                  pl.BlockSpec((tm, 1), lambda i, j: (i, 0)),
                  pl.BlockSpec((Dp, tv), lambda i, j: (0, j))],
        out_specs=(pl.BlockSpec((tm, tv), lambda i, j: (i, j)),
                   pl.BlockSpec((tm, 1), lambda i, j: (i, 0))),
        scratch_shapes=[pltpu.VMEM((tm, 1), jnp.float32)] * 3,
        compiler_params=pltpu.CompilerParams(
            dimension_semantics=("parallel", "arbitrary")),
    )(xp, gp, lp, wp)
    return logits[:M, :V], loss[:M, 0]


# ----------------------------------------------------------------------------
# Model pieces (glue around the Pallas kernels)
# ----------------------------------------------------------------------------
def aves_encoder(p, audio_values):
    """Synthetic AVES: frame raw audio and project (fused GELU) to aves size."""
    B, L = audio_values.shape
    F = p["frame_size"]
    T = L // F
    frames = audio_values[:, : T * F].reshape(B * T, F)
    feats = pallas_matmul(frames, p["w_frame"], activation="gelu")
    return feats.reshape(B, T, -1)                  # (B, T_audio, A)


def adapter_network(p, x, y):
    """Cross-attention adapter: query = x, key/value = y, project to gemma D."""
    B, Tq, A = x.shape
    _, Tk, _ = y.shape
    q = pallas_matmul(x.reshape(B * Tq, A), p["wq"]).reshape(B, Tq, A)
    kv = pallas_matmul(y.reshape(B * Tk, A), p["wkv"]).reshape(B, Tk, 2 * A)
    k, v = kv[..., :A], kv[..., A:]
    key_mask = jnp.ones((B, Tk), jnp.int32)
    attn = pallas_mha(q, k, v, key_mask, num_heads=1, causal=False,
                      scale=1.0 / math.sqrt(A))
    out = pallas_matmul(attn.reshape(B * Tq, A), p["wo"])
    return out.reshape(B, Tq, -1)                   # (B, T_audio, D_gemma)


def embed_tokens(p, ids):
    # Row gather instead of one-hot @ embed (bandwidth-only).
    # TODO(synk): at Gemma scale this would be a Pallas DMA-gather driven by a
    # scalar-prefetched id table; jnp.take is sufficient here.
    return jnp.take(p["embed"], ids, axis=0)


def gemma_forward(p, inputs_embeds, attention_mask, labels):
    """One-layer Gemma-style causal LM with tied LM head and HF-style CE loss."""
    B, S, D = inputs_embeds.shape
    H = p["num_heads"]
    hd = D // H
    V = p["embed"].shape[0]

    # Gemma applies the sqrt(D) normalizer to inputs_embeds inside the model.
    x2d = (inputs_embeds.astype(jnp.float32) *
           jnp.sqrt(jnp.float32(D))).reshape(B * S, D)

    # --- self-attention block (fused RMSNorm + single QKV matmul) ---
    qkv = pallas_rmsnorm_matmul(x2d, p["ln1"], p["wqkv"]).reshape(B, S, 3 * D)
    q, k, v = qkv[..., :D], qkv[..., D:2 * D], qkv[..., 2 * D:]
    attn = pallas_mha(q, k, v, attention_mask, num_heads=H, causal=True,
                      scale=1.0 / math.sqrt(hd))              # (B, S, D)
    x2d = pallas_matmul(attn.reshape(B * S, D), p["wo"], residual=x2d)

    # --- GeGLU MLP block (fused RMSNorm + gate/up + gelu*, fused residual) ---
    gated = pallas_rmsnorm_geglu(x2d, p["ln2"], p["w_gate"], p["w_up"])
    x2d = pallas_matmul(gated, p["w_down"], residual=x2d)

    # --- fused final norm + tied LM head + shifted CE (ignore_index=-100) ---
    shifted = jnp.concatenate(
        [labels[:, 1:], jnp.full((B, 1), -100, labels.dtype)],
        axis=1).reshape(B * S)
    logits2d, tok_loss = pallas_lmhead_ce(x2d, p["ln_f"], p["embed_t"], shifted)
    logits = logits2d.reshape(B, S, V)

    valid = (shifted != -100).astype(jnp.float32)
    loss = jnp.sum(tok_loss) / jnp.maximum(jnp.sum(valid), 1.0)
    return loss, logits


def biolm_forward(params, input_ids, attention_mask, labels, audio_values,
                  audio_attention_mask, suffix_input_ids, suffix_attention_mask,
                  suffix_labels):
    audio_embeds = aves_encoder(params["aves"], audio_values)
    audio_embeds = adapter_network(params["adapter"], audio_embeds, audio_embeds)
    B, Ta, _ = audio_embeds.shape
    audio_labels = jnp.full((B, Ta), -100, jnp.int32)

    prefix_embeds = embed_tokens(params["gemma"], input_ids)
    suffix_embeds = embed_tokens(params["gemma"], suffix_input_ids)

    inputs_embeds = jnp.concatenate(
        [prefix_embeds, audio_embeds, suffix_embeds], axis=1)
    attn_mask = jnp.concatenate(
        [attention_mask, audio_attention_mask, suffix_attention_mask], axis=1)
    labels_all = jnp.concatenate([labels, audio_labels, suffix_labels], axis=1)

    return gemma_forward(params["gemma"], inputs_embeds, attn_mask, labels_all)


# ----------------------------------------------------------------------------
# Deterministic parameter init (synthetic small config, lane-dense dims)
# ----------------------------------------------------------------------------
def init_params(key, *, frame_size=128, aves_dim=128, gemma_dim=256,
                num_heads=2, intermediate=512, vocab=512):
    ks = jax.random.split(key, 16)
    sc = 0.02
    bf = jnp.bfloat16

    def rnd(k, shape):
        return sc * jax.random.normal(k, shape, jnp.float32)

    aves = {
        "frame_size": frame_size,
        "w_frame": rnd(ks[0], (frame_size, aves_dim)).astype(bf),
    }
    adapter = {
        "wq": rnd(ks[1], (aves_dim, aves_dim)).astype(bf),
        "wkv": rnd(ks[2], (aves_dim, 2 * aves_dim)).astype(bf),
        "wo": rnd(ks[4], (aves_dim, gemma_dim)).astype(bf),
    }
    embed = rnd(ks[5], (vocab, gemma_dim))
    gemma = {
        "num_heads": num_heads,
        "embed": embed,                               # (V, D) f32, gather
        "embed_t": embed.T.astype(bf),                # (D, V) bf16, tied head
        "ln1": jnp.zeros((gemma_dim,), jnp.float32),
        "ln2": jnp.zeros((gemma_dim,), jnp.float32),
        "ln_f": jnp.zeros((gemma_dim,), jnp.float32),
        "wqkv": rnd(ks[6], (gemma_dim, 3 * gemma_dim)).astype(bf),
        "wo": rnd(ks[9], (gemma_dim, gemma_dim)).astype(bf),
        "w_gate": rnd(ks[10], (gemma_dim, intermediate)).astype(bf),
        "w_up": rnd(ks[11], (gemma_dim, intermediate)).astype(bf),
        "w_down": rnd(ks[12], (intermediate, gemma_dim)).astype(bf),
    }
    return {"aves": aves, "adapter": adapter, "gemma": gemma}


# ----------------------------------------------------------------------------
# Main
# ----------------------------------------------------------------------------
if __name__ == "__main__":
    # TODO(synk): pretrained Gemma-7B / AVES checkpoints and HF generate()/chat()
    # have no Pallas equivalent; synthetic small-config weights are used instead.
    B, P, SX, FRAME, VOCAB = 2, 4, 4, 128, 512
    T_AUDIO = 16
    L_AUDIO = T_AUDIO * FRAME

    params = init_params(jax.random.PRNGKey(0))

    keys = jax.random.split(jax.random.PRNGKey(0), 4)
    input_ids = jax.random.randint(keys[1], (B, P), 0, VOCAB, dtype=jnp.int32)
    suffix_input_ids = jax.random.randint(keys[2], (B, SX), 0, VOCAB,
                                          dtype=jnp.int32)
    audio_values = jax.random.normal(keys[3], (B, L_AUDIO), jnp.float32)

    attention_mask = jnp.ones((B, P), jnp.int32)
    suffix_attention_mask = jnp.ones((B, SX), jnp.int32)
    audio_attention_mask = jnp.ones((B, T_AUDIO), jnp.int32)
    labels = jnp.full((B, P), -100, jnp.int32)          # prefix masked from loss
    suffix_labels = suffix_input_ids.astype(jnp.int32)  # learn the suffix tokens

    loss, logits = biolm_forward(
        params, input_ids, attention_mask, labels, audio_values,
        audio_attention_mask, suffix_input_ids, suffix_attention_mask,
        suffix_labels)

    jax.block_until_ready((loss, logits))
    assert logits.shape == (B, P + T_AUDIO + SX, VOCAB)
    assert jnp.isfinite(loss)
    print("KERNEL_OK")
</pallas_src>

<mosaic_0001>
module attributes {stable_mosaic.version = 11 : i64} {
  func.func @_matmul_kernel(%arg0: i32, %arg1: i32, %arg2: i32, %arg3: memref<32x128xbf16, #tpu.memory_space<vmem>>, %arg4: memref<128x128xbf16, #tpu.memory_space<vmem>>, %arg5: memref<32x128xf32, #tpu.memory_space<vmem>>, %arg6: memref<32x128xf32, #tpu.memory_space<vmem>>) attributes {dimension_semantics = [#tpu.dimension_semantics<parallel>, #tpu.dimension_semantics<parallel>, #tpu.dimension_semantics<arbitrary>], iteration_bounds = array<i64: 1, 1, 1>, scalar_prefetch = 0 : i64, scratch_operands = 1 : i64, tpu.core_type = #tpu.core_type<tc>, window_params = [{transform_indices = @transform_0, window_bounds = array<i64: 32, 128>}, {transform_indices = @transform_1, window_bounds = array<i64: 128, 128>}, {transform_indices = @transform_2, window_bounds = array<i64: 32, 128>}]} {
    %c0_i32 = arith.constant 0 : i32
    %0 = arith.cmpi eq, %arg2, %c0_i32 : i32
    %1 = arith.extui %0 : i1 to i32
    %c0_i32_0 = arith.constant 0 : i32
    %2 = arith.cmpi ne, %1, %c0_i32_0 : i32
    scf.if %2 {
      %cst_10 = arith.constant 0.000000e+00 : f32
      %12 = vector.broadcast %cst_10 : f32 to vector<32x128xf32>
      %c0_11 = arith.constant 0 : index
      %c0_12 = arith.constant 0 : index
      %13 = vector.load %arg6[%c0_11, %c0_12] : memref<32x128xf32, #tpu.memory_space<vmem>>, vector<32x128xf32>
      tpu.vector_store %arg6[%c0_11, %c0_12], %12 {strides = array<i32>} : memref<32x128xf32, #tpu.memory_space<vmem>>, vector<32x128xf32>,
    } else {
    }
    %c0 = arith.constant 0 : index
    %c0_1 = arith.constant 0 : index
    %3 = vector.load %arg6[%c0, %c0_1] : memref<32x128xf32, #tpu.memory_space<vmem>>, vector<32x128xf32>
    %c0_2 = arith.constant 0 : index
    %c0_3 = arith.constant 0 : index
    %4 = vector.load %arg3[%c0_2, %c0_3] : memref<32x128xbf16, #tpu.memory_space<vmem>>, vector<32x128xbf16>
    %c0_4 = arith.constant 0 : index
    %c0_5 = arith.constant 0 : index
    %5 = vector.load %arg4[%c0_4, %c0_5] : memref<128x128xbf16, #tpu.memory_space<vmem>>, vector<128x128xbf16>
    %cst = arith.constant dense<0.000000e+00> : vector<32x128xf32>
    %6 = tpu.matmul %4, %5, %cst {dimension_numbers = #tpu.dot_dimension_numbers<[1], [0], [0], [1], [0, 0, 1, 1], [], []>} : vector<32x128xbf16>, vector<128x128xbf16>, vector<32x128xf32> -> vector<32x128xf32>
    %7 = arith.addf %3, %6 : vector<32x128xf32>
    %c0_6 = arith.constant 0 : index
    %c0_7 = arith.constant 0 : index
    %8 = vector.load %arg6[%c0_6, %c0_7] : memref<32x128xf32, #tpu.memory_space<vmem>>, vector<32x128xf32>
    tpu.vector_store %arg6[%c0_6, %c0_7], %7 {strides = array<i32>} : memref<32x128xf32, #tpu.memory_space<vmem>>, vector<32x128xf32>,
    %c0_i32_8 = arith.constant 0 : i32
    %9 = arith.cmpi eq, %arg2, %c0_i32_8 : i32
    %10 = arith.extui %9 : i1 to i32
    %c0_i32_9 = arith.constant 0 : i32
    %11 = arith.cmpi ne, %10, %c0_i32_9 : i32
    scf.if %11 {
      %c0_10 = arith.constant 0 : index
      %c0_11 = arith.constant 0 : index
      %12 = vector.load %arg6[%c0_10, %c0_11] : memref<32x128xf32, #tpu.memory_space<vmem>>, vector<32x128xf32>
      %13 = arith.mulf %12, %12 : vector<32x128xf32>
      %14 = arith.mulf %12, %13 : vector<32x128xf32>
      %cst_12 = arith.constant 4.471500e-02 : f32
      %15 = vector.broadcast %cst_12 : f32 to vector<32x128xf32>
      %16 = arith.mulf %15, %14 : vector<32x128xf32>
      %17 = arith.addf %12, %16 : vector<32x128xf32>
      %cst_13 = arith.constant 0.797884583 : f32
      %18 = vector.broadcast %cst_13 : f32 to vector<32x128xf32>
      %19 = arith.mulf %18, %17 : vector<32x128xf32>
      %20 = math.tanh %19 : vector<32x128xf32>
      %cst_14 = arith.constant 1.000000e+00 : f32
      %21 = vector.broadcast %cst_14 : f32 to vector<32x128xf32>
      %22 = arith.addf %21, %20 : vector<32x128xf32>
      %cst_15 = arith.constant 5.000000e-01 : f32
      %23 = vector.broadcast %cst_15 : f32 to vector<32x128xf32>
      %24 = arith.mulf %23, %22 : vector<32x128xf32>
      %25 = arith.mulf %12, %24 : vector<32x128xf32>
      %c0_16 = arith.constant 0 : index
      %c0_17 = arith.constant 0 : index
      %26 = vector.load %arg5[%c0_16, %c0_17] : memref<32x128xf32, #tpu.memory_space<vmem>>, vector<32x128xf32>
      tpu.vector_store %arg5[%c0_16, %c0_17], %25 {strides = array<i32>} : memref<32x128xf32, #tpu.memory_space<vmem>>, vector<32x128xf32>,
    } else {
    }
    return
  }
  func.func @transform_0(%arg0: i32, %arg1: i32, %arg2: i32) -> (i32, i32) {
    %c0_i32 = arith.constant 0 : i32
    return %arg0, %arg2 : i32, i32
  }
  func.func @transform_1(%arg0: i32, %arg1: i32, %arg2: i32) -> (i32, i32) {
    %c0_i32 = arith.constant 0 : i32
    return %arg2, %arg1 : i32, i32
  }
  func.func @transform_2(%arg0: i32, %arg1: i32, %arg2: i32) -> (i32, i32) {
    %c0_i32 = arith.constant 0 : i32
    return %arg0, %arg1 : i32, i32
  }
}

</mosaic_0001>

<llo_original>
// kernel: tpu_custom_call.1
$region0: #{tpu_custom_call.1}
  #allocation0 [shape = 'u32[]', space=smem, size = 0x4, offset = 0x4, fixed_abs, tag = 'smem constant byte address 0x4 - core index']
  #allocation1 [shape = 'u32[144,128]{1,0:T(1,128)}', space=vmem, size = 0x12000, scoped, tag = 'internal scratch']
  #allocation2 [shape = 'f32[32,128]{1,0:T(8,128)}', space=vmem, size = 0x4000, scoped, tag = 'scratch operand']
  %s0 = inlined_call_operand.hbm [shape: bf16[32,128], index: 0, kind: input, shape index: {}]
  %s1 = inlined_call_operand.hbm [shape: bf16[128,128], index: 1, kind: input, shape index: {}]
  %s2 = inlined_call_operand.hbm [shape: f32[32,128], index: 2, kind: output, shape index: {}]
  %s3 = sld [smem:[#allocation0]]
  $region34: #{tpu_custom_call.1} parent=0
    _
  %s5 = ssub.s32 1, %s3
  %s6 = scalar_select 0, %s5, %s3
  $region1: #{tpu_custom_call.1} parent=0
    #allocation3 [shape = 'u8[8192]{0}', space=vmem, size = 0x2000, scoped, tag = 'input window, operand 0, single buffered']
    #allocation4 [shape = 's32[1]{0}', space=sflag, size = 0x4, scoped, tag = 'scoped memory for tpu_custom_call.1']
    #allocation5 [shape = 's32[1]{0}', space=sflag, size = 0x4, scoped, tag = 'scoped memory for tpu_custom_call.1']
    #allocation6 [shape = 'u8[32768]{0}', space=vmem, size = 0x8000, scoped, tag = 'input window, operand 1, single buffered']
    #allocation7 [shape = 's32[1]{0}', space=sflag, size = 0x4, scoped, tag = 'scoped memory for tpu_custom_call.1']
    #allocation8 [shape = 'u8[16384]{0}', space=vmem, size = 0x4000, scoped, tag = 'output window, operand 0, single buffered']
    %7 = vsyncpa [#allocation4], 0
    %8 = vsyncpa [#allocation7], 0
    %9 = vsyncpa [#allocation5], 0
    // Predicated region
    $region2: #{tpu_custom_call.1} parent=1 // pred_check
      _
    $region3: #{tpu_custom_call.1} parent=1 // pred_check_branch
      %11 = sbr.rel (0) target = $region5
    $region4: #{tpu_custom_call.1} parent=1 // pred_region
      %s13 = ssub.s32 256, 256
      %14 = vsyncadd [#allocation4], %s13
      %s15 = sshll.u32 [#allocation3], 4
      %s16 = int_to_ptr.vmem [resolvable:$true] %s15
      %21 = dma.hbm_to_vmem [thread:$0]  %s0, 256, %s16, [#allocation4], 64, 64, 4
    $region5: #{tpu_custom_call.1} parent=1 // pred_fallthru
      _
    // Predicated region
    $region6: #{tpu_custom_call.1} parent=1 // pred_check
      _
    $region7: #{tpu_custom_call.1} parent=1 // pred_check_branch
      %23 = sbr.rel (0) target = $region9
    $region8: #{tpu_custom_call.1} parent=1 // pred_region
      %s25 = ssub.s32 1024, 1024
      %26 = vsyncadd [#allocation7], %s25
      %s27 = sshll.u32 [#allocation6], 4
      %s28 = int_to_ptr.vmem [resolvable:$true] %s27
      %33 = dma.hbm_to_vmem [thread:$0]  %s1, 1024, %s28, [#allocation7], 64, 64, 4
    $region9: #{tpu_custom_call.1} parent=1 // pred_fallthru
      _
    // Predicated region
    $region10: #{tpu_custom_call.1} parent=1 // pred_check
      _
    $region11: #{tpu_custom_call.1} parent=1 // pred_check_branch
      %35 = sbr.rel (0) target = $region13
    $region12: #{tpu_custom_call.1} parent=1 // pred_region
      %36 = dma.done [#allocation4], 256
    $region13: #{tpu_custom_call.1} parent=1 // pred_fallthru
      _
    // Predicated region
    $region14: #{tpu_custom_call.1} parent=1 // pred_check
      _
    $region15: #{tpu_custom_call.1} parent=1 // pred_check_branch
      %38 = sbr.rel (0) target = $region17
    $region16: #{tpu_custom_call.1} parent=1 // pred_region
      %39 = dma.done [#allocation7], 1024
    $region17: #{tpu_custom_call.1} parent=1 // pred_fallthru
      _
    %p41 = scmp.eq.s32.totalorder 0, 0
    // Predicated region
    $region18: #{tpu_custom_call.1} parent=1 // pred_check
      %p42 = pneg %p41
    $region19: #{tpu_custom_call.1} parent=1 // pred_check_branch
      %44 = sbr.rel (%p42) target = $region21
    $region20: #{tpu_custom_call.1} parent=1 // pred_region
      %45 = vst [vmem:[#allocation2] sm:$0xff] 0.0
      %46 = vst [vmem:[#allocation2 + $0x8] sm:$0xff] 0.0
      %47 = vst [vmem:[#allocation2 + $0x10] sm:$0xff] 0.0
      %48 = vst [vmem:[#allocation2 + $0x18] sm:$0xff] 0.0
    $region21: #{tpu_custom_call.1} parent=1 // pred_fallthru
      _
    %v49 = vld [vmem:[#allocation2] sm:$0xff]
    %v50 = vld [vmem:[#allocation2 + $0x8] sm:$0xff]
    %v51 = vld [vmem:[#allocation2 + $0x10] sm:$0xff]
    %v52 = vld [vmem:[#allocation2 + $0x18] sm:$0xff]
    %v53 = vld [vmem:[#allocation3] sm:$0xf]
    %v54 = vld [vmem:[#allocation3 + $0x4] sm:$0xf]
    %v55 = vld [vmem:[#allocation3 + $0x8] sm:$0xf]
    %v56 = vld [vmem:[#allocation3 + $0xc] sm:$0xf]
    %v57 = vld [vmem:[#allocation6] sm:$0xf]
    %v58 = vld [vmem:[#allocation6 + $0x4] sm:$0xf]
    %v59 = vld [vmem:[#allocation6 + $0x8] sm:$0xf]
    %v60 = vld [vmem:[#allocation6 + $0xc] sm:$0xf]
    %v61 = vld [vmem:[#allocation6 + $0x10] sm:$0xf]
    %v62 = vld [vmem:[#allocation6 + $0x14] sm:$0xf]
    %v63 = vld [vmem:[#allocation6 + $0x18] sm:$0xf]
    %v64 = vld [vmem:[#allocation6 + $0x1c] sm:$0xf]
    %v65 = vld [vmem:[#allocation6 + $0x20] sm:$0xf]
    %v66 = vld [vmem:[#allocation6 + $0x24] sm:$0xf]
    %v67 = vld [vmem:[#allocation6 + $0x28] sm:$0xf]
    %v68 = vld [vmem:[#allocation6 + $0x2c] sm:$0xf]
    %v69 = vld [vmem:[#allocation6 + $0x30] sm:$0xf]
    %v70 = vld [vmem:[#allocation6 + $0x34] sm:$0xf]
    %v71 = vld [vmem:[#allocation6 + $0x38] sm:$0xf]
    %v72 = vld [vmem:[#allocation6 + $0x3c] sm:$0xf]
    %v77 = vunpack.c.l.b16 %v53
    %v78 = vunpack.c.l.b16 %v54
    %v79 = vunpack.c.l.b16 %v55
    %v80 = vunpack.c.l.b16 %v56
    %v81 = vpack.c.b16 %v78, %v77
    %v82 = vpack.c.b16 %v80, %v79
    %v101 = vunpack.c.l.b16 %v57
    %v102 = vunpack.c.l.b16 %v58
    %v103 = vunpack.c.l.b16 %v59
    %v104 = vunpack.c.l.b16 %v60
    %v105 = vunpack.c.l.b16 %v61
    %v106 = vunpack.c.l.b16 %v62
    %v107 = vunpack.c.l.b16 %v63
    %v108 = vunpack.c.l.b16 %v64
    %v109 = vunpack.c.l.b16 %v65
    %v110 = vunpack.c.l.b16 %v66
    %v111 = vunpack.c.l.b16 %v67
    %v112 = vunpack.c.l.b16 %v68
    %v113 = vunpack.c.l.b16 %v69
    %v114 = vunpack.c.l.b16 %v70
    %v115 = vunpack.c.l.b16 %v71
    %v116 = vunpack.c.l.b16 %v72
    %v117 = vpack.c.b16 %v102, %v101
    %v118 = vpack.c.b16 %v104, %v103
    %v119 = vpack.c.b16 %v106, %v105
    %v120 = vpack.c.b16 %v108, %v107
    %v121 = vpack.c.b16 %v110, %v109
    %v122 = vpack.c.b16 %v112, %v111
    %v123 = vpack.c.b16 %v114, %v113
    %v124 = vpack.c.b16 %v116, %v115
    %133 = vmatprep.subr.bf16.mxu0 0
    %134 = vmatpush1.bf16.msra.mxu0 %v117
    %135 = vmatprep.subr.bf16.mxu0 0
    %136 = vmatpush1.bf16.msra.mxu0 %v118
    %137 = vmatprep.subr.bf16.mxu0 0
    %138 = vmatpush1.bf16.msra.mxu0 %v119
    %139 = vmatprep.subr.bf16.mxu0 0
    %140 = vmatpush1.bf16.msra.mxu0 %v120
    %141 = vmatprep.subr.bf16.mxu0 0
    %142 = vmatpush1.bf16.msra.mxu0 %v121
    %143 = vmatprep.subr.bf16.mxu0 0
    %144 = vmatpush1.bf16.msra.mxu0 %v122
    %145 = vmatprep.subr.bf16.mxu0 0
    %146 = vmatpush1.bf16.msra.mxu0 %v123
    %147 = vmatprep.subr.bf16.mxu0 0
    %148 = vmatpush1.bf16.msra.mxu0 %v124
    %149 = vmatprep.subr.bf16.mxu0 0
    %150 = vmatpush1.bf16.msra.mxu0 0
    %151 = vmatprep.subr.bf16.mxu0 0
    %152 = vmatpush1.bf16.msra.mxu0 0
    %153 = vmatprep.subr.bf16.mxu0 0
    %154 = vmatpush1.bf16.msra.mxu0 0
    %155 = vmatprep.subr.bf16.mxu0 0
    %156 = vmatpush1.bf16.msra.mxu0 0
    %157 = vmatprep.subr.bf16.mxu0 0
    %158 = vmatpush1.bf16.msra.mxu0 0
    %159 = vmatprep.subr.bf16.mxu0 0
    %160 = vmatpush1.bf16.msra.mxu0 0
    %161 = vmatprep.subr.bf16.mxu0 0
    %162 = vmatpush1.bf16.msra.mxu0 0
    %163 = vmatprep.subr.bf16.mxu0 0
    %164 = vmatpush1.bf16.msra.mxu0 0
    %165 = vmatprep.mubr.bf16.mxu0 0
    %166 = vmatmul.mubr.bf16.gmra.mrb[0].mxu0 %v81
    %v167 = vpop.f32.mrb[0].mxu0
    %v168 = vadd.f32 0.0, %v167
    %v169 = vpop.f32.mrb[0].mxu0
    %v170 = vpop.f32.mrb[0].mxu0
    %v171 = vadd.f32 0.0, %v170
    %v172 = vpop.f32.mrb[0].mxu0
    %173 = vmatprep.mubr.bf16.mxu0 0
    %174 = vmatmul.mubr.bf16.gmra.mrb[0].mxu0 %v82
    %v175 = vpop.f32.mrb[0].mxu0
    %v176 = vadd.f32 0.0, %v175
    %v177 = vpop.f32.mrb[0].mxu0
    %v178 = vpop.f32.mrb[0].mxu0
    %v179 = vadd.f32 0.0, %v178
    %v180 = vpop.f32.mrb[0].mxu0
    %181 = vdwg.mxu0
    %v182 = vadd.f32 %v49, %v168
    %v183 = vadd.f32 %v50, %v171
    %v184 = vadd.f32 %v51, %v176
    %v185 = vadd.f32 %v52, %v179
    %186 = vst [vmem:[#allocation2] sm:$0xff] %v182
    %187 = vst [vmem:[#allocation2 + $0x8] sm:$0xff] %v183
    %188 = vst [vmem:[#allocation2 + $0x10] sm:$0xff] %v184
    %189 = vst [vmem:[#allocation2 + $0x18] sm:$0xff] %v185
    // Predicated region
    $region22: #{tpu_custom_call.1} parent=1 // pred_check
      %p190 = pneg %p41
    $region23: #{tpu_custom_call.1} parent=1 // pred_check_branch
      %192 = sbr.rel (%p190) target = $region25
    $region24: #{tpu_custom_call.1} parent=1 // pred_region
      %v193 = vld [vmem:[#allocation2] sm:$0xff]
      %v194 = vld [vmem:[#allocation2 + $0x8] sm:$0xff]
      %v195 = vld [vmem:[#allocation2 + $0x10] sm:$0xff]
      %v196 = vld [vmem:[#allocation2 + $0x18] sm:$0xff]
      %v197 = vmul.f32 %v193, %v193
      %v198 = vmul.f32 %v194, %v194
      %v199 = vmul.f32 %v195, %v195
      %v200 = vmul.f32 %v196, %v196
      %v201 = vmul.f32 %v193, %v197
      %v202 = vmul.f32 %v194, %v198
      %v203 = vmul.f32 %v195, %v199
      %v204 = vmul.f32 %v196, %v200
      %v205 = vmul.f32 %v201, 0.044715
      %v206 = vmul.f32 %v202, 0.044715
      %v207 = vmul.f32 %v203, 0.044715
      %v208 = vmul.f32 %v204, 0.044715
      %v209 = vadd.f32 %v193, %v205
      %v210 = vadd.f32 %v194, %v206
      %v211 = vadd.f32 %v195, %v207
      %v212 = vadd.f32 %v196, %v208
      %v213 = vmul.f32 %v209, 0.7978846
      %v214 = vmul.f32 %v210, 0.7978846
      %v215 = vmul.f32 %v211, 0.7978846
      %v216 = vmul.f32 %v212, 0.7978846
      %v217 = vtanh.pop %v213
      %v218 = vtanh.pop %v214
      %v219 = vtanh.pop %v215
      %v220 = vtanh.pop %v216
      %v221 = vadd.f32 %v217, 1.0
      %v222 = vadd.f32 %v218, 1.0
      %v223 = vadd.f32 %v219, 1.0
      %v224 = vadd.f32 %v220, 1.0
      %v225 = vmul.f32 %v221, 0.5
      %v226 = vmul.f32 %v222, 0.5
      %v227 = vmul.f32 %v223, 0.5
      %v228 = vmul.f32 %v224, 0.5
      %v229 = vmul.f32 %v193, %v225
      %v230 = vmul.f32 %v194, %v226
      %v231 = vmul.f32 %v195, %v227
      %v232 = vmul.f32 %v196, %v228
      %233 = vst [vmem:[#allocation8] sm:$0xff] %v229
      %234 = vst [vmem:[#allocation8 + $0x8] sm:$0xff] %v230
      %235 = vst [vmem:[#allocation8 + $0x10] sm:$0xff] %v231
      %236 = vst [vmem:[#allocation8 + $0x18] sm:$0xff] %v232
    $region25: #{tpu_custom_call.1} parent=1 // pred_fallthru
      _
    // Predicated region
    $region26: #{tpu_custom_call.1} parent=1 // pred_check
      _
    $region27: #{tpu_custom_call.1} parent=1 // pred_check_branch
      %238 = sbr.rel (0) target = $region29
    $region28: #{tpu_custom_call.1} parent=1 // pred_region
      %s240 = ssub.s32 512, 512
      %241 = vsyncadd [#allocation5], %s240
      %s242 = sshll.u32 [#allocation8], 4
      %s243 = int_to_ptr.vmem [resolvable:$true] %s242
      %248 = dma.vmem_to_hbm [thread:$0]  %s243, 512, %s2, [#allocation5], 128, 128, 8
    $region29: #{tpu_custom_call.1} parent=1 // pred_fallthru
      _
    // Predicated region
    $region30: #{tpu_custom_call.1} parent=1 // pred_check
      _
    $region31: #{tpu_custom_call.1} parent=1 // pred_check_branch
      %250 = sbr.rel (0) target = $region33
    $region32: #{tpu_custom_call.1} parent=1 // pred_region
      %251 = dma.done [#allocation5], 512
    $region33: #{tpu_custom_call.1} parent=1 // pred_fallthru
      _
    %252 = vsyncpa [#allocation4], 1
    %253 = vsyncpa [#allocation7], 1
    %254 = vsyncpa [#allocation5], 1

</llo_original>
